<compile_context>
chip_gen: v7x
topology: tpu7x:2x2x1
jax: 0.10.0
libtpu: 0.0.40
codegen_flags: <defaults>
</compile_context>

<pallas_src>
import jax
import jax.numpy as jnp
import numpy as np
from jax.experimental import pallas as pl
from jax.experimental.pallas import tpu as pltpu


# --------------------------------------------------------------------------- #
# Pass 1: rationale-invariant encoder work (per batch element, computed once).
# --------------------------------------------------------------------------- #
def encode_kernel(x_ref, wq_ref, wkt_ref, wv_ref, s_ref, v_ref):
    x = x_ref[0]                                          # [T, E] one batch element
    H = wq_ref.shape[1]
    inv_sqrt_h = 1.0 / jnp.sqrt(jnp.float32(H))

    # CLS query row only; fold the 1/sqrt(H) scale into q0.
    q0 = jnp.dot(x[0:1, :], wq_ref[...],
                 preferred_element_type=jnp.float32) * inv_sqrt_h        # [1, H]

    # Never build K: scores[t] = x[t,:] . (Wk @ q0)   (Wk arrives pre-transposed).
    c = jnp.dot(q0.astype(wkt_ref.dtype), wkt_ref[...],
                preferred_element_type=jnp.float32)                      # [1, E]
    s = jnp.einsum('qe,te->qt', c.astype(x.dtype), x,
                   preferred_element_type=jnp.float32)                   # [1, T]
    s_ref[...] = s[None]                                                 # [1, 1, T]

    # V projection -- the only full [T,E]x[E,H] matmul left in pass 1.
    v = jnp.dot(x, wv_ref[...], preferred_element_type=jnp.float32)      # [T, H]
    v_ref[...] = v[None].astype(v_ref.dtype)                             # [1, T, H]


# --------------------------------------------------------------------------- #
# Pass 2: one block of Rt rationales: masked softmax + CLS context + pooler +
#         the per-rationale label column, all in a single grid step.
# --------------------------------------------------------------------------- #
def receiver_kernel(z_ref, s_ref, v_ref, x0_ref, wp_ref, bp_ref,
                    wo_ref, bo_ref, out_ref):
    mask = z_ref[...].astype(jnp.float32)                 # [B, Rt, T]

    # attention_mask: masked-out keys get a large negative bias (f32 VPU math).
    scores = s_ref[...] + (1.0 - mask) * (-1e9)           # [B, Rt, T] (scores broadcast over Rt)
    m = jnp.max(scores, axis=-1, keepdims=True)
    p = jnp.exp(scores - m)
    # EUP approx reciprocal for the softmax normalizer (frees the VPU divide).
    attn = p * pl.reciprocal(jnp.sum(p, axis=-1, keepdims=True), approx=True)

    # CLS context on the MXU: ctx[b,r,h] = sum_t attn[b,r,t] * v[b,t,h]
    ctx = jnp.einsum('brt,bth->brh', attn.astype(v_ref.dtype), v_ref[...],
                     preferred_element_type=jnp.float32)   # [B, Rt, H]
    hidden0 = ctx + x0_ref[...][:, None, :]                # residual on the CLS row (f32)

    B, Rt, H = hidden0.shape
    # BERT-style pooler as ONE [B*Rt, H] x [H, H] MXU matmul (M = B*Rt, not B).
    pooled = jnp.tanh(
        jnp.dot(hidden0.reshape(B * Rt, H).astype(wp_ref.dtype), wp_ref[...],
                preferred_element_type=jnp.float32) + bp_ref[...])       # [B*Rt, H]
    pooled = pooled.reshape(B, Rt, H)

    # output_layer: Dropout(eval = identity) -> Linear -> Sigmoid, but only label
    # column r is needed for rationale r: row-wise dot against the W_out column block.
    logit = jnp.sum(pooled * wo_ref[...][None, :, :], axis=-1) + bo_ref[...]   # [B, Rt]
    out_ref[...] = jax.nn.sigmoid(logit)                  # [B, Rt] block of the output


def receiver_forward(z, x, params, compute_dtype=jnp.float32):
    """z: [B, R, T] (0/1 rationales), x: [B, T, E].  Returns [B, R] probs (f32)."""
    B, R, T = z.shape
    E = x.shape[-1]
    H = params['wp'].shape[0]
    L = params['wo'].shape[1]
    assert R <= L, "rationale index i must map to an existing label column i"
    assert params['wq'].shape[1] == E, "residual connection requires hidden == embed"

    cd = compute_dtype                                    # bf16 recommended at real sizes
    x_c = x.astype(cd)
    wq = params['wq'].astype(cd)
    wk_t = jnp.transpose(params['wk']).astype(cd)         # (H, E) pre-transposed (no in-kernel transpose)
    wv = params['wv'].astype(cd)
    wp = params['wp'].astype(cd)
    bp = params['bp'].astype(jnp.float32)

    # ---------------- pass 1: invariant V + CLS scores (once, batch-parallel) ----
    scores0, v = pl.pallas_call(
        encode_kernel,
        out_shape=(jax.ShapeDtypeStruct((B, 1, T), jnp.float32),
                   jax.ShapeDtypeStruct((B, T, H), cd)),
        grid_spec=pltpu.PrefetchScalarGridSpec(
            num_scalar_prefetch=0,
            grid=(B,),
            in_specs=[
                pl.BlockSpec((1, T, E), lambda b: (b, 0, 0)),   # x[b]
                pl.BlockSpec((E, H), lambda b: (0, 0)),         # W_q
                pl.BlockSpec((H, E), lambda b: (0, 0)),         # W_k^T
                pl.BlockSpec((E, H), lambda b: (0, 0)),         # W_v
            ],
            out_specs=[
                pl.BlockSpec((1, 1, T), lambda b: (b, 0, 0)),   # CLS scores row
                pl.BlockSpec((1, T, H), lambda b: (b, 0, 0)),   # V[b]
            ],
        ),
        compiler_params=pltpu.CompilerParams(
            dimension_semantics=("parallel",),                  # v7x: shard batch over both TCs
            vmem_limit_bytes=64 * 1024 * 1024),
    )(x_c, wq, wk_t, wv)

    # ---------------- pass 2: blocked rationale axis ------------------------------
    rt = R      # all rationales in one block (R <= num_labels is small);
                # at large R pick rt as a multiple of 8 that divides R.
    z_c = z.astype(jnp.bfloat16)                          # 0/1 exact in bf16; halves the per-step DMA
    x0 = x[:, 0, :].astype(jnp.float32)                   # CLS residual row, kept in f32
    wo_cols = jnp.transpose(params['wo'])[:R].astype(jnp.float32)   # (R, H): row i == W_out[:, i]
    bo_cols = params['bo'][:, :R].astype(jnp.float32)                # (1, R)

    out = pl.pallas_call(
        receiver_kernel,
        out_shape=jax.ShapeDtypeStruct((B, R), jnp.float32),
        grid_spec=pltpu.PrefetchScalarGridSpec(
            num_scalar_prefetch=0,
            grid=(R // rt,),
            in_specs=[
                pl.BlockSpec((B, rt, T), lambda i: (0, i, 0)),  # rationale block
                pl.BlockSpec((B, 1, T), lambda i: (0, 0, 0)),   # precomputed CLS scores
                pl.BlockSpec((B, T, H), lambda i: (0, 0, 0)),   # precomputed V
                pl.BlockSpec((B, E), lambda i: (0, 0)),         # x[:, 0, :] (residual)
                pl.BlockSpec((H, H), lambda i: (0, 0)),         # W_pooler
                pl.BlockSpec((1, H), lambda i: (0, 0)),         # b_pooler
                pl.BlockSpec((rt, H), lambda i: (i, 0)),        # W_out columns of this block
                pl.BlockSpec((1, rt), lambda i: (0, i)),        # b_out of this block
            ],
            out_specs=pl.BlockSpec((B, rt), lambda i: (0, i)),
        ),
        # Independent rationale blocks -> "parallel"; TODO(synk): at real sizes add
        # pipeline_mode=pl.Buffered(1) on the invariant inputs (or tile B) for v7x VMEM.
        compiler_params=pltpu.CompilerParams(
            dimension_semantics=("parallel",),
            vmem_limit_bytes=64 * 1024 * 1024),
    )(z_c, scores0, v, x0, wp, bp, wo_cols, bo_cols)

    return out                                            # [B, R]


def receiver_reference(z, x, params):
    """Pure-JAX mirror of the ORIGINAL (unoptimized) module math."""
    B, R, T = z.shape
    H = params['wp'].shape[0]
    outs = []
    for i in range(R):
        mask = z[:, i, :].astype(jnp.float32)
        q = jnp.einsum('bte,eh->bth', x, params['wq'])
        k = jnp.einsum('bte,eh->bth', x, params['wk'])
        v = jnp.einsum('bte,eh->bth', x, params['wv'])
        scores = jnp.einsum('bqh,bkh->bqk', q, k) / jnp.sqrt(jnp.float32(H))
        scores = scores + (1.0 - mask)[:, None, :] * (-1e9)
        m = jnp.max(scores, axis=-1, keepdims=True)
        p = jnp.exp(scores - m)
        attn = p / jnp.sum(p, axis=-1, keepdims=True)
        hidden = jnp.einsum('bqk,bkh->bqh', attn, v) + x
        pooled = jnp.tanh(hidden[:, 0, :] @ params['wp'] + params['bp'][0])
        y = jax.nn.sigmoid(pooled @ params['wo'] + params['bo'][0])
        outs.append(y[:, i])
    return jnp.stack(outs, axis=1)


if __name__ == "__main__":
    B, T, E, L, R = 2, 8, 32, 11, 4   # hidden_size == E, num_labels == L, R rationales (R <= L)
    H = E

    key = jax.random.PRNGKey(0)
    keys = jax.random.split(key, 10)
    scale = 0.1
    params = {
        'wq': scale * jax.random.normal(keys[0], (E, H), jnp.float32),
        'wk': scale * jax.random.normal(keys[1], (E, H), jnp.float32),
        'wv': scale * jax.random.normal(keys[2], (E, H), jnp.float32),
        'wp': scale * jax.random.normal(keys[3], (H, H), jnp.float32),
        'bp': scale * jax.random.normal(keys[4], (1, H), jnp.float32),
        'wo': scale * jax.random.normal(keys[5], (H, L), jnp.float32),
        'bo': scale * jax.random.normal(keys[6], (1, L), jnp.float32),
    }

    x = jax.random.normal(keys[7], (B, T, E), jnp.float32)
    z = jax.random.bernoulli(keys[8], 0.5, (B, R, T)).astype(jnp.float32)

    out = receiver_forward(z, x, params)
    out = jax.block_until_ready(out)

    ref = receiver_reference(z, x, params)
    assert out.shape == (B, R)
    # Tolerance accounts for the EUP approx reciprocal in the softmax normalizer.
    np.testing.assert_allclose(np.asarray(out), np.asarray(ref), rtol=2e-3, atol=2e-3)
    print("KERNEL_OK")
</pallas_src>

<mosaic_0001>
module attributes {stable_mosaic.version = 11 : i64} {
  func.func @encode_kernel(%arg0: i32, %arg1: memref<1x8x32xf32, #tpu.memory_space<vmem>>, %arg2: memref<32x32xf32, #tpu.memory_space<vmem>>, %arg3: memref<32x32xf32, #tpu.memory_space<vmem>>, %arg4: memref<32x32xf32, #tpu.memory_space<vmem>>, %arg5: memref<1x1x8xf32, #tpu.memory_space<vmem>>, %arg6: memref<1x8x32xf32, #tpu.memory_space<vmem>>) attributes {dimension_semantics = [#tpu.dimension_semantics<parallel>], iteration_bounds = array<i64: 2>, scalar_prefetch = 0 : i64, scratch_operands = 0 : i64, tpu.core_type = #tpu.core_type<tc>, window_params = [{transform_indices = @transform_0, window_bounds = array<i64: 1, 8, 32>}, {pipeline_mode = #tpu.pipeline_mode<synchronous>, transform_indices = @transform_1, window_bounds = array<i64: 32, 32>}, {pipeline_mode = #tpu.pipeline_mode<synchronous>, transform_indices = @transform_2, window_bounds = array<i64: 32, 32>}, {pipeline_mode = #tpu.pipeline_mode<synchronous>, transform_indices = @transform_3, window_bounds = array<i64: 32, 32>}, {transform_indices = @transform_4, window_bounds = array<i64: 1, 1, 8>}, {transform_indices = @transform_5, window_bounds = array<i64: 1, 8, 32>}]} {
    %c0 = arith.constant 0 : index
    %c0_0 = arith.constant 0 : index
    %c0_1 = arith.constant 0 : index
    %0 = vector.load %arg1[%c0, %c0_0, %c0_1] : memref<1x8x32xf32, #tpu.memory_space<vmem>>, vector<1x8x32xf32>
    %1 = vector.shape_cast %0 : vector<1x8x32xf32> to vector<8x32xf32>
    %cst = arith.constant 3.200000e+01 : f32
    %2 = math.sqrt %cst : f32
    %cst_2 = arith.constant 1.000000e+00 : f32
    %3 = arith.divf %cst_2, %2 : f32
    %4 = vector.extract_strided_slice %1 {offsets = [0, 0], sizes = [1, 32], strides = [1, 1]} : vector<8x32xf32> to vector<1x32xf32>
    %c0_3 = arith.constant 0 : index
    %c0_4 = arith.constant 0 : index
    %5 = vector.load %arg2[%c0_3, %c0_4] : memref<32x32xf32, #tpu.memory_space<vmem>>, vector<32x32xf32>
    %cst_5 = arith.constant dense<0.000000e+00> : vector<1x32xf32>
    %6 = tpu.matmul %4, %5, %cst_5 {dimension_numbers = #tpu.dot_dimension_numbers<[1], [0], [0], [1], [0, 0, 1, 1], [], []>} : vector<1x32xf32>, vector<32x32xf32>, vector<1x32xf32> -> vector<1x32xf32>
    %7 = vector.broadcast %3 : f32 to vector<1x32xf32>
    %8 = arith.mulf %6, %7 : vector<1x32xf32>
    %c0_6 = arith.constant 0 : index
    %c0_7 = arith.constant 0 : index
    %9 = vector.load %arg3[%c0_6, %c0_7] : memref<32x32xf32, #tpu.memory_space<vmem>>, vector<32x32xf32>
    %cst_8 = arith.constant dense<0.000000e+00> : vector<1x32xf32>
    %10 = tpu.matmul %8, %9, %cst_8 {dimension_numbers = #tpu.dot_dimension_numbers<[1], [0], [0], [1], [0, 0, 1, 1], [], []>} : vector<1x32xf32>, vector<32x32xf32>, vector<1x32xf32> -> vector<1x32xf32>
    "tpu.trace_start"() <{level = 10 : i32, message = "qe,te->qt"}> : () -> ()
    %cst_9 = arith.constant dense<0.000000e+00> : vector<1x8xf32>
    %11 = tpu.matmul %10, %1, %cst_9 {dimension_numbers = #tpu.dot_dimension_numbers<[1], [1], [0], [0], [0, 0, 1, 0], [], []>} : vector<1x32xf32>, vector<8x32xf32>, vector<1x8xf32> -> vector<1x8xf32>
    "tpu.trace_stop"() : () -> ()
    %12 = vector.shape_cast %11 : vector<1x8xf32> to vector<1x1x8xf32>
    %c0_10 = arith.constant 0 : index
    %c0_11 = arith.constant 0 : index
    %c0_12 = arith.constant 0 : index
    %13 = vector.load %arg5[%c0_10, %c0_11, %c0_12] : memref<1x1x8xf32, #tpu.memory_space<vmem>>, vector<1x1x8xf32>
    tpu.vector_store %arg5[%c0_10, %c0_11, %c0_12], %12 {strides = array<i32>} : memref<1x1x8xf32, #tpu.memory_space<vmem>>, vector<1x1x8xf32>,
    %c0_13 = arith.constant 0 : index
    %c0_14 = arith.constant 0 : index
    %14 = vector.load %arg4[%c0_13, %c0_14] : memref<32x32xf32, #tpu.memory_space<vmem>>, vector<32x32xf32>
    %cst_15 = arith.constant dense<0.000000e+00> : vector<8x32xf32>
    %15 = tpu.matmul %1, %14, %cst_15 {dimension_numbers = #tpu.dot_dimension_numbers<[1], [0], [0], [1], [0, 0, 1, 1], [], []>} : vector<8x32xf32>, vector<32x32xf32>, vector<8x32xf32> -> vector<8x32xf32>
    %16 = vector.shape_cast %15 : vector<8x32xf32> to vector<1x8x32xf32>
    %c0_16 = arith.constant 0 : index
    %c0_17 = arith.constant 0 : index
    %c0_18 = arith.constant 0 : index
    %17 = vector.load %arg6[%c0_16, %c0_17, %c0_18] : memref<1x8x32xf32, #tpu.memory_space<vmem>>, vector<1x8x32xf32>
    tpu.vector_store %arg6[%c0_16, %c0_17, %c0_18], %16 {strides = array<i32>} : memref<1x8x32xf32, #tpu.memory_space<vmem>>, vector<1x8x32xf32>,
    return
  }
  func.func @transform_0(%arg0: i32) -> (i32, i32, i32) {
    %c0_i32 = arith.constant 0 : i32
    %c0_i32_0 = arith.constant 0 : i32
    %c0_i32_1 = arith.constant 0 : i32
    return %arg0, %c0_i32, %c0_i32_0 : i32, i32, i32
  }
  func.func @transform_1(%arg0: i32) -> (i32, i32) {
    %c0_i32 = arith.constant 0 : i32
    %c0_i32_0 = arith.constant 0 : i32
    %c0_i32_1 = arith.constant 0 : i32
    return %c0_i32, %c0_i32_0 : i32, i32
  }
  func.func @transform_2(%arg0: i32) -> (i32, i32) {
    %c0_i32 = arith.constant 0 : i32
    %c0_i32_0 = arith.constant 0 : i32
    %c0_i32_1 = arith.constant 0 : i32
    return %c0_i32, %c0_i32_0 : i32, i32
  }
  func.func @transform_3(%arg0: i32) -> (i32, i32) {
    %c0_i32 = arith.constant 0 : i32
    %c0_i32_0 = arith.constant 0 : i32
    %c0_i32_1 = arith.constant 0 : i32
    return %c0_i32, %c0_i32_0 : i32, i32
  }
  func.func @transform_4(%arg0: i32) -> (i32, i32, i32) {
    %c0_i32 = arith.constant 0 : i32
    %c0_i32_0 = arith.constant 0 : i32
    %c0_i32_1 = arith.constant 0 : i32
    return %arg0, %c0_i32, %c0_i32_0 : i32, i32, i32
  }
  func.func @transform_5(%arg0: i32) -> (i32, i32, i32) {
    %c0_i32 = arith.constant 0 : i32
    %c0_i32_0 = arith.constant 0 : i32
    %c0_i32_1 = arith.constant 0 : i32
    return %arg0, %c0_i32, %c0_i32_0 : i32, i32, i32
  }
}

</mosaic_0001>

<llo_original>
// kernel: tpu_custom_call.1
$region0: #{tpu_custom_call.1}
  #allocation0 [shape = 'u32[]', space=smem, size = 0x4, offset = 0x4, fixed_abs, tag = 'smem constant byte address 0x4 - core index']
  #allocation1 [shape = 'u32[144,128]{1,0:T(1,128)}', space=vmem, size = 0x12000, scoped, tag = 'internal scratch']
  %s0 = inlined_call_operand.hbm [shape: f32[2,8,32], index: 0, kind: input, shape index: {}]
  %s1 = inlined_call_operand.hbm [shape: f32[32,32], index: 1, kind: input, shape index: {}]
  %s2 = inlined_call_operand.hbm [shape: f32[32,32], index: 2, kind: input, shape index: {}]
  %s3 = inlined_call_operand.hbm [shape: f32[32,32], index: 3, kind: input, shape index: {}]
  %s4 = inlined_call_operand.hbm [shape: f32[2,1,8], index: 4, kind: output, shape index: {0}]
  %s5 = inlined_call_operand.hbm [shape: f32[2,8,32], index: 5, kind: output, shape index: {1}]
  %6 = xla_tuple %s4, %s5
  %s7 = sld [smem:[#allocation0]]
  $region73: #{tpu_custom_call.1} parent=0
    _
  %s9 = ssub.s32 1, %s7
  %s10 = scalar_select 0, %s9, %s7
  $region1: #{tpu_custom_call.1} parent=0
    #allocation2 [shape = 'u8[8192]{0}', space=vmem, size = 0x2000, scoped, tag = 'input window, operand 0']
    #allocation3 [shape = 's32[2]{0}', space=sflag, size = 0x8, scoped, tag = 'scoped memory for tpu_custom_call.1']
    #allocation4 [shape = 's32[2]{0}', space=sflag, size = 0x8, scoped, tag = 'scoped memory for tpu_custom_call.1']
    #allocation5 [shape = 'u8[16384]{0}', space=vmem, size = 0x4000, scoped, tag = 'input window, operand 1, single buffered']
    #allocation6 [shape = 's32[1]{0}', space=sflag, size = 0x4, scoped, tag = 'scoped memory for tpu_custom_call.1']
    #allocation7 [shape = 'u8[16384]{0}', space=vmem, size = 0x4000, scoped, tag = 'input window, operand 2, single buffered']
    #allocation8 [shape = 'u8[16384]{0}', space=vmem, size = 0x4000, scoped, tag = 'input window, operand 3, single buffered']
    #allocation9 [shape = 's32[1]{0}', space=sflag, size = 0x4, scoped, tag = 'scoped memory for tpu_custom_call.1']
    #allocation10 [shape = 'u8[1024]{0}', space=vmem, size = 0x400, scoped, tag = 'output window, operand 0']
    #allocation11 [shape = 'u8[8192]{0}', space=vmem, size = 0x2000, scoped, tag = 'output window, operand 1']
    #allocation12 [shape = 's32[2]{0}', space=sflag, size = 0x8, scoped, tag = 'scoped memory for tpu_custom_call.1']
    %11 = vsyncpa [#allocation3], 0
    %s12 = scalar_lea.sflag [#allocation3], 1
    %13 = vsyncpa %s12, 0
    %14 = vsyncpa [#allocation6], 0
    %15 = vsyncpa [#allocation9], 0
    %16 = vsyncpa [#allocation4], 0
    %s17 = scalar_lea.sflag [#allocation4], 1
    %18 = vsyncpa %s17, 0
    %19 = vsyncpa [#allocation12], 0
    %s20 = scalar_lea.sflag [#allocation12], 1
    %21 = vsyncpa %s20, 0
    loop: start=0, step=1, limit=4
    $region2: #{tpu_custom_call.1} parent=1 // loop_pre_header
      _
    $region3: #{tpu_custom_call.1} parent=1 // loop_header
      %s23 = sphi 0, %s27
      %p24 = scmp.ge.s32.totalorder %s23, 4
      %s33 = sphi 0, %s35
      %s36 = sphi 0, %s33
      %s37 = sphi 0, %s36
      %s53 = sphi 0, %s37
      %s57 = sphi 0, %s57
      %s59 = sphi 0, %s57
      %s60 = sphi 0, %s59
      %s74 = sphi 0, %s60
      %s78 = sphi 0, %s78
      %s80 = sphi 0, %s78
      %s81 = sphi 0, %s80
      %s95 = sphi 0, %s81
      %s99 = sphi 0, %s99
      %s101 = sphi 0, %s99
      %s102 = sphi 0, %s101
      %s116 = sphi 0, %s102
      %s122 = sphi 0, %s124
      %s125 = sphi 0, %s122
      %s126 = sphi 0, %s125
      %s142 = sphi 0, %s126
      %s148 = sphi 0, %s150
      %s151 = sphi 0, %s148
      %s152 = sphi 0, %s151
      %s168 = sphi 0, %s152
    $region4: #{tpu_custom_call.1} parent=1 // loop_header_branch
      %26 = sbr.rel (%p24) target = $region8
    $region5: #{tpu_custom_call.1} parent=1 // loop_body
      %s28 = ssub.s32 %s23, 1
      %s29 = ssub.s32 %s23, 2
      %s30 = sadd.s32 %s23, 1
      %s31 = ssub.s32 %s23, %s30
      %p32 = scmp.eq.s32.totalorder %s31, 0
      %s34 = sadd.s32 %s33, 1
      %s35 = scalar_select %p32, %s33, %s34
      %p38 = pneg %p32
      %p39 = scmp.eq.s32.totalorder %s23, 1
      %p40 = por %p38, %p39
      %p41 = scmp.ne.s32.totalorder %s33, %s36
      %p42 = scmp.eq.s32.totalorder %s23, 0
      %p43 = por %p41, %p42
      %p44 = scmp.ne.s32.totalorder %s33, %s36
      %p45 = scmp.eq.s32.totalorder %s28, 1
      %p46 = por %p44, %p45
      %p47 = scmp.ne.s32.totalorder %s36, %s37
      %p48 = scmp.eq.s32.totalorder %s28, 0
      %p49 = por %p47, %p48
      %p50 = scmp.ne.s32.totalorder %s36, %s37
      %p51 = scmp.eq.s32.totalorder %s29, 1
      %p52 = por %p50, %p51
      %p54 = scmp.ne.s32.totalorder %s37, %s53
      %p55 = scmp.eq.s32.totalorder %s29, 0
      %p56 = por %p54, %p55
      %s58 = sadd.s32 %s57, 1
      %p61 = scmp.eq.s32.totalorder %s23, 1
      %p62 = scmp.ne.s32.totalorder %s57, %s59
      %p63 = scmp.eq.s32.totalorder %s23, 0
      %p64 = por %p62, %p63
      %p65 = scmp.ne.s32.totalorder %s57, %s59
      %p66 = scmp.eq.s32.totalorder %s28, 1
      %p67 = por %p65, %p66
      %p68 = scmp.ne.s32.totalorder %s59, %s60
      %p69 = scmp.eq.s32.totalorder %s28, 0
      %p70 = por %p68, %p69
      %p71 = scmp.ne.s32.totalorder %s59, %s60
      %p72 = scmp.eq.s32.totalorder %s29, 1
      %p73 = por %p71, %p72
      %p75 = scmp.ne.s32.totalorder %s60, %s74
      %p76 = scmp.eq.s32.totalorder %s29, 0
      %p77 = por %p75, %p76
      %s79 = sadd.s32 %s78, 1
      %p82 = scmp.eq.s32.totalorder %s23, 1
      %p83 = scmp.ne.s32.totalorder %s78, %s80
      %p84 = scmp.eq.s32.totalorder %s23, 0
      %p85 = por %p83, %p84
      %p86 = scmp.ne.s32.totalorder %s78, %s80
      %p87 = scmp.eq.s32.totalorder %s28, 1
      %p88 = por %p86, %p87
      %p89 = scmp.ne.s32.totalorder %s80, %s81
      %p90 = scmp.eq.s32.totalorder %s28, 0
      %p91 = por %p89, %p90
      %p92 = scmp.ne.s32.totalorder %s80, %s81
      %p93 = scmp.eq.s32.totalorder %s29, 1
      %p94 = por %p92, %p93
      %p96 = scmp.ne.s32.totalorder %s81, %s95
      %p97 = scmp.eq.s32.totalorder %s29, 0
      %p98 = por %p96, %p97
      %s100 = sadd.s32 %s99, 1
      %p103 = scmp.eq.s32.totalorder %s23, 1
      %p104 = scmp.ne.s32.totalorder %s99, %s101
      %p105 = scmp.eq.s32.totalorder %s23, 0
      %p106 = por %p104, %p105
      %p107 = scmp.ne.s32.totalorder %s99, %s101
      %p108 = scmp.eq.s32.totalorder %s28, 1
      %p109 = por %p107, %p108
      %p110 = scmp.ne.s32.totalorder %s101, %s102
      %p111 = scmp.eq.s32.totalorder %s28, 0
      %p112 = por %p110, %p111
      %p113 = scmp.ne.s32.totalorder %s101, %s102
      %p114 = scmp.eq.s32.totalorder %s29, 1
      %p115 = por %p113, %p114
      %p117 = scmp.ne.s32.totalorder %s102, %s116
      %p118 = scmp.eq.s32.totalorder %s29, 0
      %p119 = por %p117, %p118
      %s120 = ssub.s32 %s23, %s30
      %p121 = scmp.eq.s32.totalorder %s120, 0
      %s123 = sadd.s32 %s122, 1
      %s124 = scalar_select %p121, %s122, %s123
      %p127 = pneg %p121
      %p128 = scmp.eq.s32.totalorder %s23, 1
      %p129 = por %p127, %p128
      %p130 = scmp.ne.s32.totalorder %s122, %s125
      %p131 = scmp.eq.s32.totalorder %s23, 0
      %p132 = por %p130, %p131
      %p133 = scmp.ne.s32.totalorder %s122, %s125
      %p134 = scmp.eq.s32.totalorder %s28, 1
      %p135 = por %p133, %p134
      %p136 = scmp.ne.s32.totalorder %s125, %s126
      %p137 = scmp.eq.s32.totalorder %s28, 0
      %p138 = por %p136, %p137
      %p139 = scmp.ne.s32.totalorder %s125, %s126
      %p140 = scmp.eq.s32.totalorder %s29, 1
      %p141 = por %p139, %p140
      %p143 = scmp.ne.s32.totalorder %s126, %s142
      %p144 = scmp.eq.s32.totalorder %s29, 0
      %p145 = por %p143, %p144
      %s146 = ssub.s32 %s23, %s30
      %p147 = scmp.eq.s32.totalorder %s146, 0
      %s149 = sadd.s32 %s148, 1
      %s150 = scalar_select %p147, %s148, %s149
      %p153 = pneg %p147
      %p154 = scmp.eq.s32.totalorder %s23, 1
      %p155 = por %p153, %p154
      %p156 = scmp.ne.s32.totalorder %s148, %s151
      %p157 = scmp.eq.s32.totalorder %s23, 0
      %p158 = por %p156, %p157
      %p159 = scmp.ne.s32.totalorder %s148, %s151
      %p160 = scmp.eq.s32.totalorder %s28, 1
      %p161 = por %p159, %p160
      %p162 = scmp.ne.s32.totalorder %s151, %s152
      %p163 = scmp.eq.s32.totalorder %s28, 0
      %p164 = por %p162, %p163
      %p165 = scmp.ne.s32.totalorder %s151, %s152
      %p166 = scmp.eq.s32.totalorder %s29, 1
      %p167 = por %p165, %p166
      %p169 = scmp.ne.s32.totalorder %s152, %s168
      %p170 = scmp.eq.s32.totalorder %s29, 0
      %p171 = por %p169, %p170
      %p172 = scmp.le.s32.totalorder 1, %s23
      %p173 = scmp.lt.s32.totalorder %s23, 3
      %p174 = pnand %p172, %p173
      %p175 = pneg %p174
      // Predicated region
      $region9: #{tpu_custom_call.1} parent=5 // pred_check
        _
      $region10: #{tpu_custom_call.1} parent=5 // pred_check_branch
        %177 = sbr.rel (%p174) target = $region12
      $region11: #{tpu_custom_call.1} parent=5 // pred_region
        %s178 = ssub.s32 %s23, 1
        // Predicated region
        $region13: #{tpu_custom_call.1} parent=11 // pred_check
          %p179 = pneg %p70
        $region14: #{tpu_custom_call.1} parent=11 // pred_check_branch
          %181 = sbr.rel (%p179) target = $region16
        $region15: #{tpu_custom_call.1} parent=11 // pred_region
          %s183 = ssub.s32 512, 512
          %184 = vsyncadd [#allocation6], %s183
          %s185 = sshll.u32 [#allocation5], 4
          %s186 = int_to_ptr.vmem [resolvable:$true] %s185
          %191 = dma.hbm_to_vmem [thread:$0]  %s1, 512, %s186, [#allocation6], 128, 128, 8
        $region16: #{tpu_custom_call.1} parent=11 // pred_fallthru
          _
        // Predicated region
        $region17: #{tpu_custom_call.1} parent=11 // pred_check
          %p192 = pneg %p91
        $region18: #{tpu_custom_call.1} parent=11 // pred_check_branch
          %194 = sbr.rel (%p192) target = $region20
        $region19: #{tpu_custom_call.1} parent=11 // pred_region
          %s196 = ssub.s32 512, 512
          %197 = vsyncadd [#allocation6], %s196
          %s198 = sshll.u32 [#allocation7], 4
          %s199 = int_to_ptr.vmem [resolvable:$true] %s198
          %204 = dma.hbm_to_vmem [thread:$0]  %s2, 512, %s199, [#allocation6], 128, 128, 8
        $region20: #{tpu_custom_call.1} parent=11 // pred_fallthru
          _
        // Predicated region
        $region21: #{tpu_custom_call.1} parent=11 // pred_check
          %p205 = pneg %p112
        $region22: #{tpu_custom_call.1} parent=11 // pred_check_branch
          %207 = sbr.rel (%p205) target = $region24
        $region23: #{tpu_custom_call.1} parent=11 // pred_region
          %s209 = ssub.s32 512, 512
          %210 = vsyncadd [#allocation9], %s209
          %s211 = sshll.u32 [#allocation8], 4
          %s212 = int_to_ptr.vmem [resolvable:$true] %s211
          %217 = dma.hbm_to_vmem [thread:$0]  %s3, 512, %s212, [#allocation9], 128, 128, 8
        $region24: #{tpu_custom_call.1} parent=11 // pred_fallthru
          _
      $region12: #{tpu_custom_call.1} parent=5 // pred_fallthru
        _
      %p218 = scmp.lt.s32.totalorder %s23, 2
      // Predicated region
      $region25: #{tpu_custom_call.1} parent=5 // pred_check
        %p219 = pneg %p218
      $region26: #{tpu_custom_call.1} parent=5 // pred_check_branch
        %221 = sbr.rel (%p219) target = $region28
      $region27: #{tpu_custom_call.1} parent=5 // pred_region
        // Predicated region
        $region29: #{tpu_custom_call.1} parent=27 // pred_check
          %p222 = pneg %p43
        $region30: #{tpu_custom_call.1} parent=27 // pred_check_branch
          %224 = sbr.rel (%p222) target = $region32
        $region31: #{tpu_custom_call.1} parent=27 // pred_region
          %s225 = sand.u32 %s33, 1
          %s226 = scalar_lea.sflag [#allocation3], %s225
          %s227 = sand.u32 %s33, 1
          %s228 = smul.addr %s227, 8
          %s229 = scalar_lea.vmem [#allocation2], %s228
          %s231 = ssub.s32 128, 128
          %232 = vsyncadd %s226, %s231
          %s233 = smul.addr %s23, 128
          %s234 = scalar_lea.hbm %s0, %s233
          %s236 = sshll.u32 %s229, 4
          %s237 = int_to_ptr.vmem [resolvable:$true] %s236
          %239 = dma.hbm_to_vmem [thread:$0]  %s234, 128, %s237, %s226
        $region32: #{tpu_custom_call.1} parent=27 // pred_fallthru
          _
      $region28: #{tpu_custom_call.1} parent=5 // pred_fallthru
        _
      %p240 = scmp.le.s32.totalorder 1, %s23
      %p241 = scmp.lt.s32.totalorder %s23, 3
      %p242 = pnand %p240, %p241
      %p243 = pneg %p242
      // Predicated region
      $region33: #{tpu_custom_call.1} parent=5 // pred_check
        _
      $region34: #{tpu_custom_call.1} parent=5 // pred_check_branch
        %245 = sbr.rel (%p242) target = $region36
      $region35: #{tpu_custom_call.1} parent=5 // pred_region
        %s246 = ssub.s32 %s23, 1
        %s247 = sand.u32 %s36, 1
        %s248 = scalar_lea.sflag [#allocation3], %s247
        %s249 = sand.u32 %s36, 1
        %s250 = smul.addr %s249, 8
        %s251 = scalar_lea.vmem [#allocation2], %s250
        // Predicated region
        $region37: #{tpu_custom_call.1} parent=35 // pred_check
          %p252 = pneg %p49
        $region38: #{tpu_custom_call.1} parent=35 // pred_check_branch
          %254 = sbr.rel (%p252) target = $region40
        $region39: #{tpu_custom_call.1} parent=35 // pred_region
          %255 = dma.done %s248, 128
        $region40: #{tpu_custom_call.1} parent=35 // pred_fallthru
          _
        // Predicated region
        $region41: #{tpu_custom_call.1} parent=35 // pred_check
          %p256 = pneg %p70
        $region42: #{tpu_custom_call.1} parent=35 // pred_check_branch
          %258 = sbr.rel (%p256) target = $region44
        $region43: #{tpu_custom_call.1} parent=35 // pred_region
          %259 = dma.done [#allocation6], 512
        $region44: #{tpu_custom_call.1} parent=35 // pred_fallthru
          _
        // Predicated region
        $region45: #{tpu_custom_call.1} parent=35 // pred_check
          %p260 = pneg %p91
        $region46: #{tpu_custom_call.1} parent=35 // pred_check_branch
          %262 = sbr.rel (%p260) target = $region48
        $region47: #{tpu_custom_call.1} parent=35 // pred_region
          %263 = dma.done [#allocation6], 512
        $region48: #{tpu_custom_call.1} parent=35 // pred_fallthru
          _
        // Predicated region
        $region49: #{tpu_custom_call.1} parent=35 // pred_check
          %p264 = pneg %p112
        $region50: #{tpu_custom_call.1} parent=35 // pred_check_branch
          %266 = sbr.rel (%p264) target = $region52
        $region51: #{tpu_custom_call.1} parent=35 // pred_region
          %267 = dma.done [#allocation9], 512
        $region52: #{tpu_custom_call.1} parent=35 // pred_fallthru
          _
        %s268 = sand.u32 %s36, 1
        %s269 = scalar_lea.sflag [#allocation3], %s268
        %s270 = sand.u32 %s36, 1
        %s271 = smul.addr %s270, 8
        %s272 = scalar_lea.vmem [#allocation2], %s271
        %p273 = pneg %p49
        %p274 = pneg %p46
        %p275 = pneg %p70
        %p276 = pneg %p67
        %p277 = pneg %p91
        %p278 = pneg %p88
        %p279 = pneg %p112
        %p280 = pneg %p109
        %p281 = pneg %p138
        %p282 = pneg %p135
        %s283 = sand.u32 %s125, 1
        %s284 = scalar_lea.sflag [#allocation4], %s283
        %s285 = sand.u32 %s125, 1
        %s286 = scalar_lea.vmem [#allocation10], %s285
        %p287 = pneg %p164
        %p288 = pneg %p161
        %s289 = sand.u32 %s151, 1
        %s290 = scalar_lea.sflag [#allocation12], %s289
        %s291 = sand.u32 %s151, 1
        %s292 = smul.addr %s291, 8
        %s293 = scalar_lea.vmem [#allocation11], %s292
        %v294 = vld [vmem:[%s251] sm:$0xff]
        %v295 = vld [vmem:[#allocation5] sm:$0xff]
        %v296 = vld [vmem:[#allocation5 + $0x8] sm:$0xff]
        %v297 = vld [vmem:[#allocation5 + $0x10] sm:$0xff]
        %v298 = vld [vmem:[#allocation5 + $0x18] sm:$0xff]
        %vm299 = vcmask 261120
        %v301 = vsel %vm299, %v294, 0
        %303 = vmatprep.subr.mxu0 0.0
        %304 = vmatpush1.msra.mxu0 %v295
        %305 = vmatprep.subr.mxu0 0.0
        %306 = vmatpush1.msra.mxu0 %v296
        %307 = vmatprep.subr.mxu0 0.0
        %308 = vmatpush1.msra.mxu0 %v297
        %309 = vmatprep.subr.mxu0 0.0
        %310 = vmatpush1.msra.mxu0 %v298
        %311 = vmatprep.subr.mxu0 0.0
        %312 = vmatpush1.msra.mxu0 0.0
        %313 = vmatprep.subr.mxu0 0.0
        %314 = vmatpush1.msra.mxu0 0.0
        %315 = vmatprep.subr.mxu0 0.0
        %316 = vmatpush1.msra.mxu0 0.0
        %317 = vmatprep.subr.mxu0 0.0
        %318 = vmatpush1.msra.mxu0 0.0
        %319 = vmatprep.subr.mxu0 0.0
        %320 = vmatpush1.msra.mxu0 0.0
        %321 = vmatprep.subr.mxu0 0.0
        %322 = vmatpush1.msra.mxu0 0.0
        %323 = vmatprep.subr.mxu0 0.0
        %324 = vmatpush1.msra.mxu0 0.0
        %325 = vmatprep.subr.mxu0 0.0
        %326 = vmatpush1.msra.mxu0 0.0
        %327 = vmatprep.subr.mxu0 0.0
        %328 = vmatpush1.msra.mxu0 0.0
        %329 = vmatprep.subr.mxu0 0.0
        %330 = vmatpush1.msra.mxu0 0.0
        %331 = vmatprep.subr.mxu0 0.0
        %332 = vmatpush1.msra.mxu0 0.0
        %333 = vmatprep.subr.mxu0 0.0
        %334 = vmatpush1.msra.mxu0 0.0
        %335 = vmatprep.subr.mxu0 0.0
        %336 = vmatpush1.msra.mxu0 0.0
        %337 = vmatprep.subr.mxu0 0.0
        %338 = vmatpush1.msra.mxu0 0.0
        %339 = vmatprep.subr.mxu0 0.0
        %340 = vmatpush1.msra.mxu0 0.0
        %341 = vmatprep.subr.mxu0 0.0
        %342 = vmatpush1.msra.mxu0 0.0
        %343 = vmatprep.subr.mxu0 0.0
        %344 = vmatpush1.msra.mxu0 0.0
        %345 = vmatprep.subr.mxu0 0.0
        %346 = vmatpush1.msra.mxu0 0.0
        %347 = vmatprep.subr.mxu0 0.0
        %348 = vmatpush1.msra.mxu0 0.0
        %349 = vmatprep.subr.mxu0 0.0
        %350 = vmatpush1.msra.mxu0 0.0
        %351 = vmatprep.subr.mxu0 0.0
        %352 = vmatpush1.msra.mxu0 0.0
        %353 = vmatprep.subr.mxu0 0.0
        %354 = vmatpush1.msra.mxu0 0.0
        %355 = vmatprep.subr.mxu0 0.0
        %356 = vmatpush1.msra.mxu0 0.0
        %357 = vmatprep.subr.mxu0 0.0
        %358 = vmatpush1.msra.mxu0 0.0
        %359 = vmatprep.subr.mxu0 0.0
        %360 = vmatpush1.msra.mxu0 0.0
        %361 = vmatprep.subr.mxu0 0.0
        %362 = vmatpush1.msra.mxu0 0.0
        %363 = vmatprep.subr.mxu0 0.0
        %364 = vmatpush1.msra.mxu0 0.0
        %365 = vmatprep.subr.mxu0 0.0
        %366 = vmatpush1.msra.mxu0 0.0
        %367 = vmatprep.mubr.f32.mxu0 0.0
        %368 = vmatmul.mubr.f32.gmra.mrb[0].mxu0 %v301
        %v369 = vpop.f32.mrb[0].mxu0
        %v370 = vadd.f32 0.0, %v369
        %v371 = vpop.f32.mrb[0].mxu0
        %372 = vdwg.mxu0
        %v373 = vmul.f32 %v370, 0.17677669
        %v374 = vld [vmem:[#allocation7] sm:$0xff]
        %v375 = vld [vmem:[#allocation7 + $0x8] sm:$0xff]
        %v376 = vld [vmem:[#allocation7 + $0x10] sm:$0xff]
        %v377 = vld [vmem:[#allocation7 + $0x18] sm:$0xff]
        %v379 = vsel %vm299, %v373, 0
        %381 = vmatprep.subr.mxu0 0.0
        %382 = vmatpush1.msra.mxu0 %v374
        %383 = vmatprep.subr.mxu0 0.0
        %384 = vmatpush1.msra.mxu0 %v375
        %385 = vmatprep.subr.mxu0 0.0
        %386 = vmatpush1.msra.mxu0 %v376
        %387 = vmatprep.subr.mxu0 0.0
        %388 = vmatpush1.msra.mxu0 %v377
        %389 = vmatprep.subr.mxu0 0.0
        %390 = vmatpush1.msra.mxu0 0.0
        %391 = vmatprep.subr.mxu0 0.0
        %392 = vmatpush1.msra.mxu0 0.0
        %393 = vmatprep.subr.mxu0 0.0
        %394 = vmatpush1.msra.mxu0 0.0
        %395 = vmatprep.subr.mxu0 0.0
        %396 = vmatpush1.msra.mxu0 0.0
        %397 = vmatprep.subr.mxu0 0.0
        %398 = vmatpush1.msra.mxu0 0.0
        %399 = vmatprep.subr.mxu0 0.0
        %400 = vmatpush1.msra.mxu0 0.0
        %401 = vmatprep.subr.mxu0 0.0
        %402 = vmatpush1.msra.mxu0 0.0
        %403 = vmatprep.subr.mxu0 0.0
        %404 = vmatpush1.msra.mxu0 0.0
        %405 = vmatprep.subr.mxu0 0.0
        %406 = vmatpush1.msra.mxu0 0.0
        %407 = vmatprep.subr.mxu0 0.0
        %408 = vmatpush1.msra.mxu0 0.0
        %409 = vmatprep.subr.mxu0 0.0
        %410 = vmatpush1.msra.mxu0 0.0
        %411 = vmatprep.subr.mxu0 0.0
        %412 = vmatpush1.msra.mxu0 0.0
        %413 = vmatprep.subr.mxu0 0.0
        %414 = vmatpush1.msra.mxu0 0.0
        %415 = vmatprep.subr.mxu0 0.0
        %416 = vmatpush1.msra.mxu0 0.0
        %417 = vmatprep.subr.mxu0 0.0
        %418 = vmatpush1.msra.mxu0 0.0
        %419 = vmatprep.subr.mxu0 0.0
        %420 = vmatpush1.msra.mxu0 0.0
        %421 = vmatprep.subr.mxu0 0.0
        %422 = vmatpush1.msra.mxu0 0.0
        %423 = vmatprep.subr.mxu0 0.0
        %424 = vmatpush1.msra.mxu0 0.0
        %425 = vmatprep.subr.mxu0 0.0
        %426 = vmatpush1.msra.mxu0 0.0
        %427 = vmatprep.subr.mxu0 0.0
        %428 = vmatpush1.msra.mxu0 0.0
        %429 = vmatprep.subr.mxu0 0.0
        %430 = vmatpush1.msra.mxu0 0.0
        %431 = vmatprep.subr.mxu0 0.0
        %432 = vmatpush1.msra.mxu0 0.0
        %433 = vmatprep.subr.mxu0 0.0
        %434 = vmatpush1.msra.mxu0 0.0
        %435 = vmatprep.subr.mxu0 0.0
        %436 = vmatpush1.msra.mxu0 0.0
        %437 = vmatprep.subr.mxu0 0.0
        %438 = vmatpush1.msra.mxu0 0.0
        %439 = vmatprep.subr.mxu0 0.0
        %440 = vmatpush1.msra.mxu0 0.0
        %441 = vmatprep.subr.mxu0 0.0
        %442 = vmatpush1.msra.mxu0 0.0
        %443 = vmatprep.subr.mxu0 0.0
        %444 = vmatpush1.msra.mxu0 0.0
        %445 = vmatprep.mubr.f32.mxu0 0.0
        %446 = vmatmul.mubr.f32.gmra.mrb[0].mxu0 %v379
        %v447 = vpop.f32.mrb[0].mxu0
        %v448 = vadd.f32 0.0, %v447
        %v449 = vpop.f32.mrb[0].mxu0
        %450 = vdwg.mxu0
        %v452 = vsel %vm299, %v448, 0
        %454 = vmatprep.subr.mxu0 0.0
        %455 = vmatpush1.xpose.msra.mxu0 %v301
        %456 = vmatprep.subr.mxu0 0.0
        %457 = vmatpush1.xpose.msra.mxu0 0.0
        %458 = vmatprep.subr.mxu0 0.0
        %459 = vmatpush1.xpose.msra.mxu0 0.0
        %460 = vmatprep.subr.mxu0 0.0
        %461 = vmatpush1.xpose.msra.mxu0 0.0
        %462 = vmatprep.subr.mxu0 0.0
        %463 = vmatpush1.xpose.msra.mxu0 0.0
        %464 = vmatprep.subr.mxu0 0.0
        %465 = vmatpush1.xpose.msra.mxu0 0.0
        %466 = vmatprep.subr.mxu0 0.0
        %467 = vmatpush1.xpose.msra.mxu0 0.0
        %468 = vmatprep.subr.mxu0 0.0
        %469 = vmatpush1.xpose.msra.mxu0 0.0
        %470 = vmatprep.subr.mxu0 0.0
        %471 = vmatpush1.xpose.msra.mxu0 0.0
        %472 = vmatprep.subr.mxu0 0.0
        %473 = vmatpush1.xpose.msra.mxu0 0.0
        %474 = vmatprep.subr.mxu0 0.0
        %475 = vmatpush1.xpose.msra.mxu0 0.0
        %476 = vmatprep.subr.mxu0 0.0
        %477 = vmatpush1.xpose.msra.mxu0 0.0
        %478 = vmatprep.subr.mxu0 0.0
        %479 = vmatpush1.xpose.msra.mxu0 0.0
        %480 = vmatprep.subr.mxu0 0.0
        %481 = vmatpush1.xpose.msra.mxu0 0.0
        %482 = vmatprep.subr.mxu0 0.0
        %483 = vmatpush1.xpose.msra.mxu0 0.0
        %484 = vmatprep.subr.mxu0 0.0
        %485 = vmatpush1.xpose.msra.mxu0 0.0
        %486 = vmatprep.subr.mxu0 0.0
        %487 = vmatpush1.xpose.msra.mxu0 0.0
        %488 = vmatprep.subr.mxu0 0.0
        %489 = vmatpush1.xpose.msra.mxu0 0.0
        %490 = vmatprep.subr.mxu0 0.0
        %491 = vmatpush1.xpose.msra.mxu0 0.0
        %492 = vmatprep.subr.mxu0 0.0
        %493 = vmatpush1.xpose.msra.mxu0 0.0
        %494 = vmatprep.subr.mxu0 0.0
        %495 = vmatpush1.xpose.msra.mxu0 0.0
        %496 = vmatprep.subr.mxu0 0.0
        %497 = vmatpush1.xpose.msra.mxu0 0.0
        %498 = vmatprep.subr.mxu0 0.0
        %499 = vmatpush1.xpose.msra.mxu0 0.0
        %500 = vmatprep.subr.mxu0 0.0
        %501 = vmatpush1.xpose.msra.mxu0 0.0
        %502 = vmatprep.subr.mxu0 0.0
        %503 = vmatpush1.xpose.msra.mxu0 0.0
        %504 = vmatprep.subr.mxu0 0.0
        %505 = vmatpush1.xpose.msra.mxu0 0.0
        %506 = vmatprep.subr.mxu0 0.0
        %507 = vmatpush1.xpose.msra.mxu0 0.0
        %508 = vmatprep.subr.mxu0 0.0
        %509 = vmatpush1.xpose.msra.mxu0 0.0
        %510 = vmatprep.subr.mxu0 0.0
        %511 = vmatpush1.xpose.msra.mxu0 0.0
        %512 = vmatprep.subr.mxu0 0.0
        %513 = vmatpush1.xpose.msra.mxu0 0.0
        %514 = vmatprep.subr.mxu0 0.0
        %515 = vmatpush1.xpose.msra.mxu0 0.0
        %516 = vmatprep.subr.mxu0 0.0
        %517 = vmatpush1.xpose.msra.mxu0 0.0
        %518 = vmatprep.mubr.f32.mxu0 0.0
        %519 = vmatmul.mubr.f32.gmra.mrb[0].mxu0 %v452
        %v520 = vpop.f32.mrb[0].mxu0
        %v521 = vadd.f32 0.0, %v520
        %v522 = vpop.f32.mrb[0].mxu0
        %523 = vdwg.mxu0
        %vm524 = vcmask 57344
        %525 = vst.msk [vmem:[%s286] sm:$0x1] %vm524, %v521
        %v526 = vld [vmem:[#allocation8] sm:$0xff]
        %v527 = vld [vmem:[#allocation8 + $0x8] sm:$0xff]
        %v528 = vld [vmem:[#allocation8 + $0x10] sm:$0xff]
        %v529 = vld [vmem:[#allocation8 + $0x18] sm:$0xff]
        %530 = vmatprep.subr.mxu0 0.0
        %531 = vmatpush1.msra.mxu0 %v526
        %532 = vmatprep.subr.mxu0 0.0
        %533 = vmatpush1.msra.mxu0 %v527
        %534 = vmatprep.subr.mxu0 0.0
        %535 = vmatpush1.msra.mxu0 %v528
        %536 = vmatprep.subr.mxu0 0.0
        %537 = vmatpush1.msra.mxu0 %v529
        %538 = vmatprep.subr.mxu0 0.0
        %539 = vmatpush1.msra.mxu0 0.0
        %540 = vmatprep.subr.mxu0 0.0
        %541 = vmatpush1.msra.mxu0 0.0
        %542 = vmatprep.subr.mxu0 0.0
        %543 = vmatpush1.msra.mxu0 0.0
        %544 = vmatprep.subr.mxu0 0.0
        %545 = vmatpush1.msra.mxu0 0.0
        %546 = vmatprep.subr.mxu0 0.0
        %547 = vmatpush1.msra.mxu0 0.0
        %548 = vmatprep.subr.mxu0 0.0
        %549 = vmatpush1.msra.mxu0 0.0
        %550 = vmatprep.subr.mxu0 0.0
        %551 = vmatpush1.msra.mxu0 0.0
        %552 = vmatprep.subr.mxu0 0.0
        %553 = vmatpush1.msra.mxu0 0.0
        %554 = vmatprep.subr.mxu0 0.0
        %555 = vmatpush1.msra.mxu0 0.0
        %556 = vmatprep.subr.mxu0 0.0
        %557 = vmatpush1.msra.mxu0 0.0
        %558 = vmatprep.subr.mxu0 0.0
        %559 = vmatpush1.msra.mxu0 0.0
        %560 = vmatprep.subr.mxu0 0.0
        %561 = vmatpush1.msra.mxu0 0.0
        %562 = vmatprep.subr.mxu0 0.0
        %563 = vmatpush1.msra.mxu0 0.0
        %564 = vmatprep.subr.mxu0 0.0
        %565 = vmatpush1.msra.mxu0 0.0
        %566 = vmatprep.subr.mxu0 0.0
        %567 = vmatpush1.msra.mxu0 0.0
        %568 = vmatprep.subr.mxu0 0.0
        %569 = vmatpush1.msra.mxu0 0.0
        %570 = vmatprep.subr.mxu0 0.0
        %571 = vmatpush1.msra.mxu0 0.0
        %572 = vmatprep.subr.mxu0 0.0
        %573 = vmatpush1.msra.mxu0 0.0
        %574 = vmatprep.subr.mxu0 0.0
        %575 = vmatpush1.msra.mxu0 0.0
        %576 = vmatprep.subr.mxu0 0.0
        %577 = vmatpush1.msra.mxu0 0.0
        %578 = vmatprep.subr.mxu0 0.0
        %579 = vmatpush1.msra.mxu0 0.0
        %580 = vmatprep.subr.mxu0 0.0
        %581 = vmatpush1.msra.mxu0 0.0
        %582 = vmatprep.subr.mxu0 0.0
        %583 = vmatpush1.msra.mxu0 0.0
        %584 = vmatprep.subr.mxu0 0.0
        %585 = vmatpush1.msra.mxu0 0.0
        %586 = vmatprep.subr.mxu0 0.0
        %587 = vmatpush1.msra.mxu0 0.0
        %588 = vmatprep.subr.mxu0 0.0
        %589 = vmatpush1.msra.mxu0 0.0
        %590 = vmatprep.subr.mxu0 0.0
        %591 = vmatpush1.msra.mxu0 0.0
        %592 = vmatprep.subr.mxu0 0.0
        %593 = vmatpush1.msra.mxu0 0.0
        %594 = vmatprep.mubr.f32.mxu0 0.0
        %595 = vmatmul.mubr.f32.gmra.mrb[0].mxu0 %v301
        %v596 = vpop.f32.mrb[0].mxu0
        %v597 = vadd.f32 0.0, %v596
        %v598 = vpop.f32.mrb[0].mxu0
        %599 = vdwg.mxu0
        %600 = vst.msk [vmem:[%s293] sm:$0xff] %vm299, %v597
        %s601 = sand.u32 %s125, 1
        %s602 = scalar_lea.sflag [#allocation4], %s601
        %s603 = sand.u32 %s125, 1
        %s604 = scalar_lea.vmem [#allocation10], %s603
        %s605 = sand.u32 %s151, 1
        %s606 = scalar_lea.sflag [#allocation12], %s605
        %s607 = sand.u32 %s151, 1
        %s608 = smul.addr %s607, 8
        %s609 = scalar_lea.vmem [#allocation11], %s608
        // Predicated region
        $region53: #{tpu_custom_call.1} parent=35 // pred_check
          %p610 = pneg %p135
        $region54: #{tpu_custom_call.1} parent=35 // pred_check_branch
          %612 = sbr.rel (%p610) target = $region56
        $region55: #{tpu_custom_call.1} parent=35 // pred_region
          %s614 = ssub.s32 16, 16
          %615 = vsyncadd %s602, %s614
          %s616 = smul.addr %s28, 16
          %s617 = scalar_lea.hbm %s4, %s616
          %s619 = sshll.u32 %s604, 4
          %s620 = int_to_ptr.vmem [resolvable:$true] %s619
          %622 = dma.vmem_to_hbm [thread:$0]  %s620, 16, %s617, %s602
        $region56: #{tpu_custom_call.1} parent=35 // pred_fallthru
          _
        // Predicated region
        $region57: #{tpu_custom_call.1} parent=35 // pred_check
          %p623 = pneg %p161
        $region58: #{tpu_custom_call.1} parent=35 // pred_check_branch
          %625 = sbr.rel (%p623) target = $region60
        $region59: #{tpu_custom_call.1} parent=35 // pred_region
          %s627 = ssub.s32 128, 128
          %628 = vsyncadd %s606, %s627
          %s629 = smul.addr %s28, 128
          %s630 = scalar_lea.hbm %s5, %s629
          %s632 = sshll.u32 %s609, 4
          %s633 = int_to_ptr.vmem [resolvable:$true] %s632
          %635 = dma.vmem_to_hbm [thread:$0]  %s633, 128, %s630, %s606
        $region60: #{tpu_custom_call.1} parent=35 // pred_fallthru
          _
      $region36: #{tpu_custom_call.1} parent=5 // pred_fallthru
        _
      %p636 = scmp.le.s32.totalorder 2, %s23
      // Predicated region
      $region61: #{tpu_custom_call.1} parent=5 // pred_check
        %p637 = pneg %p636
      $region62: #{tpu_custom_call.1} parent=5 // pred_check_branch
        %639 = sbr.rel (%p637) target = $region64
      $region63: #{tpu_custom_call.1} parent=5 // pred_region
        %s640 = ssub.s32 %s23, 2
        // Predicated region
        $region65: #{tpu_custom_call.1} parent=63 // pred_check
          %p641 = pneg %p141
        $region66: #{tpu_custom_call.1} parent=63 // pred_check_branch
          %643 = sbr.rel (%p641) target = $region68
        $region67: #{tpu_custom_call.1} parent=63 // pred_region
          %s644 = sand.u32 %s126, 1
          %s645 = scalar_lea.sflag [#allocation4], %s644
          %s646 = sand.u32 %s126, 1
          %s647 = scalar_lea.vmem [#allocation10], %s646
          %648 = dma.done %s645, 16
        $region68: #{tpu_custom_call.1} parent=63 // pred_fallthru
          _
        // Predicated region
        $region69: #{tpu_custom_call.1} parent=63 // pred_check
          %p649 = pneg %p167
        $region70: #{tpu_custom_call.1} parent=63 // pred_check_branch
          %651 = sbr.rel (%p649) target = $region72
        $region71: #{tpu_custom_call.1} parent=63 // pred_region
          %s652 = sand.u32 %s152, 1
          %s653 = scalar_lea.sflag [#allocation12], %s652
          %s654 = sand.u32 %s152, 1
          %s655 = smul.addr %s654, 8
          %s656 = scalar_lea.vmem [#allocation11], %s655
          %657 = dma.done %s653, 128
        $region72: #{tpu_custom_call.1} parent=63 // pred_fallthru
          _
      $region64: #{tpu_custom_call.1} parent=5 // pred_fallthru
        _
    $region6: #{tpu_custom_call.1} parent=1 // loop_footer
      %s27 = sadd.s32 1, %s23
    $region7: #{tpu_custom_call.1} parent=1 // loop_footer_branch
      %22 = sbr.rel target = $region3
    $region8: #{tpu_custom_call.1} parent=1 // loop_exit
      _
    %658 = vsyncpa [#allocation3], 1
    %s659 = scalar_lea.sflag [#allocation3], 1
    %660 = vsyncpa %s659, 1
    %661 = vsyncpa [#allocation6], 1
    %662 = vsyncpa [#allocation9], 1
    %663 = vsyncpa [#allocation4], 1
    %s664 = scalar_lea.sflag [#allocation4], 1
    %665 = vsyncpa %s664, 1
    %666 = vsyncpa [#allocation12], 1
    %s667 = scalar_lea.sflag [#allocation12], 1
    %668 = vsyncpa %s667, 1

</llo_original>
